<compile_context>
chip_gen: v7x
topology: tpu7x:2x2x1
jax: 0.10.0
libtpu: 0.0.40
codegen_flags: <defaults>
</compile_context>

<pallas_src>
import functools

import jax
import jax.numpy as jnp
from jax.experimental import pallas as pl
from jax.experimental.pallas import tpu as pltpu

# ---- module "parameters" (deterministic, from __init__ defaults) -----------
ALPHA0 = 0.25      # alpha[0] -> weight for positive class
ALPHA1 = 0.75      # alpha[1] -> weight for negative class
GAMMA = 2.0
SMOOTH = 1e-6

LANES = 128
_MIB = 1024 * 1024


def _cdiv(a, b):
    return (a + b - 1) // b


def _round_up(a, b):
    return _cdiv(a, b) * b


# ---- chip-aware configuration (defensive; falls back to known-good values) --
def _query_tpu_info():
    try:
        return pltpu.get_tpu_info()
    except Exception:
        return None


def _int_attr(obj, names):
    if obj is None:
        return None
    for name in names:
        v = getattr(obj, name, None)
        if v is None:
            continue
        try:
            iv = int(v)
        except (TypeError, ValueError):
            continue
        if iv > 0:
            return iv
    return None


_TPU_INFO = _query_tpu_info()
_VMEM_BYTES = _int_attr(
    _TPU_INFO, ("vmem_capacity_bytes", "vmem_bytes", "vmem_size_bytes"))
_TC_DETECTED = _int_attr(
    _TPU_INFO, ("num_tensorcores", "tensorcore_count", "num_cores",
                "core_count", "cores_per_chip"))
# Only trust plausible TensorCore counts; anything else -> unknown.
_NUM_TC = _TC_DETECTED if _TC_DETECTED in (1, 2) else None

# Block-size / scoped-VMEM policy (per review):
#   * 128-MiB-VMEM chips (v5e/v6e): (8192,128) f32 tiles, 96 MiB limit.
#   * 64-MiB chips (v7x) or unknown: (4096,128) tiles, 48 MiB limit (safe everywhere).
if _VMEM_BYTES is not None and 100 * _MIB <= _VMEM_BYTES <= 512 * _MIB:
    MAX_BLOCK_ROWS = 8192
    VMEM_LIMIT_BYTES = 96 * _MIB
else:
    MAX_BLOCK_ROWS = 4096
    VMEM_LIMIT_BYTES = 48 * _MIB

# Leading "core slab" axis: match the detected TensorCore count; if unknown,
# keep the previously-validated 2-slab split (harmless serial loop on 1-TC chips).
NUM_CORE_SLABS = _NUM_TC if _NUM_TC is not None else 2


def _sublane_pack(dtype):
    # sub-32-bit dtypes pack along sublanes: 32 rows for 1-byte, 16 for 2-byte.
    itemsize = jnp.dtype(dtype).itemsize
    return max(8, 32 // max(1, itemsize))


def _pow(x, gamma):
    # gamma == 2 in the default config; keep the cheap VPU path for that case.
    if float(gamma) == 2.0:
        return x * x
    return jnp.power(x, gamma)


# ---- kernel -----------------------------------------------------------------
def _focal_sums_kernel(prob_ref, tgt_ref, out_ref, *, block_rows,
                       blocks_per_core, n_valid, tail_start, need_mask,
                       tgt_is_float):
    """Accumulate per-lane partial sums across the (arbitrary) reduction axis.

    out_ref block layout (4, 128):
      row 0: sum of unweighted pos loss   row 1: sum of unweighted neg loss
      row 2: sum of pos_mask              row 3: sum of neg_mask
    """
    @pl.when(pl.program_id(1) == 0)
    def _():
        out_ref[...] = jnp.zeros_like(out_ref)

    prob = prob_ref[...].astype(jnp.float32)
    if tgt_is_float:
        tgt = tgt_ref[...].astype(jnp.float32)
        pos = tgt == 1.0
        neg = tgt == 0.0
    else:
        tgt = tgt_ref[...].astype(jnp.int32)
        pos = tgt == 1
        neg = tgt == 0

    prob = jnp.clip(prob, SMOOTH, 1.0 - SMOOTH)
    one_m = 1.0 - prob
    base = jnp.where(pos, one_m, prob)     # (1 - p) for pos, p for neg
    larg = jnp.where(pos, prob, one_m)     # log arg: p for pos, (1 - p) for neg
    # Single transcendental per element; alpha weighting hoisted to the epilogue.
    loss_elem = _pow(base, GAMMA) * jnp.log(larg)

    def accumulate(pos_m, neg_m):
        # Keep select form (NOT float-mask multiply) so NaN from garbage rows
        # in partial blocks can never poison the sums.
        pos_loss = jnp.where(pos_m, loss_elem, 0.0)
        neg_loss = jnp.where(neg_m, loss_elem, 0.0)
        partial = jnp.concatenate(
            [jnp.sum(pos_loss, axis=0, keepdims=True),
             jnp.sum(neg_loss, axis=0, keepdims=True),
             jnp.sum(pos_m.astype(jnp.float32), axis=0, keepdims=True),
             jnp.sum(neg_m.astype(jnp.float32), axis=0, keepdims=True)],
            axis=0)
        out_ref[...] += partial            # one store per grid step

    if not need_mask:
        # Grid exactly covers the element count: no mask code generated at all.
        accumulate(pos, neg)
    else:
        g = pl.program_id(0) * blocks_per_core + pl.program_id(1)

        @pl.when(g < tail_start)           # full in-range blocks: fast path
        def _():
            accumulate(pos, neg)

        @pl.when(g >= tail_start)          # tail / clamped blocks: masked path
        def _():
            row = jax.lax.broadcasted_iota(jnp.int32, prob.shape, 0)
            lane = jax.lax.broadcasted_iota(jnp.int32, prob.shape, 1)
            flat = g * (block_rows * LANES) + row * LANES + lane
            valid = flat < n_valid
            accumulate(jnp.logical_and(pos, valid),
                       jnp.logical_and(neg, valid))


# ---- wrapper ----------------------------------------------------------------
@jax.jit
def binary_focal_loss(output, target):
    """JAX/Pallas equivalent of BinaryFocalLoss.forward (default config).

    `output` may be f32 or bf16; `target` may be f32/bf16/int8/uint8/bool.
    """
    assert output.shape == target.shape

    if target.dtype == jnp.bool_:
        # Avoid i1 blocks in the kernel; int8 keeps the 1-byte HBM footprint.
        target = target.astype(jnp.int8)

    flat_prob = output.reshape(-1)
    flat_tgt = target.reshape(-1)
    n = flat_prob.shape[0]

    # Pad only the <=127-element lane tail (usually a no-op); padded elements
    # are excluded by the in-kernel tail mask, so pad values are irrelevant.
    n_pad = _round_up(n, LANES)
    if n_pad != n:
        flat_prob = jnp.pad(flat_prob, (0, n_pad - n))
        flat_tgt = jnp.pad(flat_tgt, (0, n_pad - n))
    rows = n_pad // LANES

    # Dtype-aware sublane rounding (32 for int8, 16 for bf16, 8 for f32).
    pack = max(_sublane_pack(flat_prob.dtype), _sublane_pack(flat_tgt.dtype))
    block_rows = min(MAX_BLOCK_ROWS, _round_up(rows, pack))
    nblk = _cdiv(rows, block_rows)
    ncores = max(1, min(NUM_CORE_SLABS, nblk))
    blocks_per_core = _cdiv(nblk, ncores)

    block_elems = block_rows * LANES
    # First global block index containing any invalid (padded / over-covered /
    # clamped) element.  Blocks < tail_start are fully valid -> unmasked path.
    tail_start = n // block_elems
    need_mask = (ncores * blocks_per_core * block_elems) != n

    prob2d = flat_prob.reshape(rows, LANES)
    tgt2d = flat_tgt.reshape(rows, LANES)

    kernel = functools.partial(
        _focal_sums_kernel,
        block_rows=block_rows,
        blocks_per_core=blocks_per_core,
        n_valid=n,
        tail_start=tail_start,
        need_mask=need_mask,
        tgt_is_float=bool(jnp.issubdtype(tgt2d.dtype, jnp.floating)),
    )

    def in_map(i, j):
        # Clamp so out-of-range blocks (last core slab) re-read valid data;
        # their contribution is zeroed by the in-kernel tail mask.
        return (jnp.minimum(i * blocks_per_core + j, nblk - 1), 0)

    # Genuine core-parallelism only when 2 TensorCores are positively detected
    # (v7x); otherwise keep the previously-validated PARALLEL configuration.
    if _NUM_TC == 2 and ncores == 2:
        leading_sem = pltpu.CORE_PARALLEL
    else:
        leading_sem = pltpu.PARALLEL

    sums = pl.pallas_call(
        kernel,
        out_shape=jax.ShapeDtypeStruct((ncores, 4, LANES), jnp.float32),
        grid_spec=pltpu.PrefetchScalarGridSpec(
            num_scalar_prefetch=0,
            grid=(ncores, blocks_per_core),
            in_specs=[
                pl.BlockSpec((block_rows, LANES), in_map),
                pl.BlockSpec((block_rows, LANES), in_map),
            ],
            out_specs=pl.BlockSpec((None, 4, LANES), lambda i, j: (i, 0, 0)),
        ),
        compiler_params=pltpu.CompilerParams(
            dimension_semantics=(leading_sem, pltpu.ARBITRARY),
            vmem_limit_bytes=VMEM_LIMIT_BYTES,
        ),
    )(prob2d, tgt2d)

    # Epilogue: apply the (exactly representable) alpha weights to the scalar
    # sums, then the data-dependent num_pos == 0 select.
    pos_loss = (-ALPHA0) * jnp.sum(sums[:, 0, :])
    neg_loss = (-ALPHA1) * jnp.sum(sums[:, 1, :])
    num_pos = jnp.sum(sums[:, 2, :])
    num_neg = jnp.sum(sums[:, 3, :])

    # PyTorch: if num_pos == 0: loss = neg_loss
    #          else:            loss = pos_loss / num_pos + neg_loss / num_neg
    return jnp.where(
        num_pos == 0.0,
        neg_loss,
        pos_loss / num_pos + neg_loss / num_neg,
    )


# ---- pure-JAX reference mirroring the PyTorch forward ------------------------
def _reference(output, target):
    prob = jnp.clip(output.astype(jnp.float32), SMOOTH, 1.0 - SMOOTH)
    tgt = target.astype(jnp.float32)
    pos_mask = (tgt == 1.0).astype(jnp.float32)
    neg_mask = (tgt == 0.0).astype(jnp.float32)
    pos_loss = (-ALPHA0) * jnp.power(1.0 - prob, GAMMA) * jnp.log(prob) * pos_mask
    neg_loss = (-ALPHA1) * jnp.power(prob, GAMMA) * jnp.log(1.0 - prob) * neg_mask
    pos_loss_s = pos_loss.sum()
    neg_loss_s = neg_loss.sum()
    num_pos = pos_mask.sum()
    num_neg = neg_mask.sum()
    return jnp.where(
        num_pos == 0.0,
        neg_loss_s,
        pos_loss_s / num_pos + neg_loss_s / num_neg,
    )


if __name__ == "__main__":
    key = jax.random.PRNGKey(0)
    k_out, k_tgt = jax.random.split(key)

    # NCHW-shaped inputs; `output` is a probability map (e.g. post-sigmoid).
    # Target is int8 (narrow HBM footprint, per review).
    shape = (2, 4, 16, 16)
    output = jax.nn.sigmoid(jax.random.normal(k_out, shape, dtype=jnp.float32))
    target = jax.random.bernoulli(k_tgt, p=0.3, shape=shape).astype(jnp.int8)

    loss = jax.block_until_ready(binary_focal_loss(output, target))
    ref = jax.block_until_ready(_reference(output, target))
    assert jnp.allclose(loss, ref, rtol=1e-5, atol=1e-6), (loss, ref)

    # Extra silent checks:
    #   (2, 3, 37, 53)  f32 + uint8 : lane pad + tail-masked single block.
    #   (4, 8, 96, 128) f32 + int8  : grid exactly covers n -> maskless fast path.
    #   (2, 4, 512, 515) bf16 + int8: multi-block reduction, 2-slab split,
    #                                 partial tail block and clamped block.
    extra_cases = [
        ((2, 3, 37, 53), 0.4, jnp.float32, jnp.uint8),
        ((4, 8, 96, 128), 0.25, jnp.float32, jnp.int8),
        ((2, 4, 512, 515), 0.3, jnp.bfloat16, jnp.int8),
    ]
    for idx, (shp, p, out_dt, tgt_dt) in enumerate(extra_cases, start=1):
        ka, kb = jax.random.split(jax.random.PRNGKey(idx))
        out_x = jax.nn.sigmoid(
            jax.random.normal(ka, shp, dtype=jnp.float32)).astype(out_dt)
        tgt_x = jax.random.bernoulli(kb, p=p, shape=shp).astype(tgt_dt)
        got = jax.block_until_ready(binary_focal_loss(out_x, tgt_x))
        want = jax.block_until_ready(_reference(out_x, tgt_x))
        assert jnp.allclose(got, want, rtol=1e-4, atol=1e-5), (shp, got, want)

    # Float targets still accepted (backward-compatible input contract).
    got_f = jax.block_until_ready(
        binary_focal_loss(output, target.astype(jnp.float32)))
    assert jnp.allclose(got_f, ref, rtol=1e-5, atol=1e-6), (got_f, ref)

    # Bool targets (converted to int8 inside the wrapper).
    got_b = jax.block_until_ready(
        binary_focal_loss(output, target.astype(jnp.bool_)))
    assert jnp.allclose(got_b, ref, rtol=1e-5, atol=1e-6), (got_b, ref)

    # num_pos == 0 branch.
    zero_tgt = jnp.zeros(shape, jnp.int8)
    got0 = jax.block_until_ready(binary_focal_loss(output, zero_tgt))
    want0 = jax.block_until_ready(_reference(output, zero_tgt))
    assert jnp.allclose(got0, want0, rtol=1e-5, atol=1e-6), (got0, want0)

    print("KERNEL_OK")
</pallas_src>

<mosaic_0001>
module attributes {stable_mosaic.version = 11 : i64} {
  func.func @_focal_sums_kernel(%arg0: i32, %arg1: i32, %arg2: memref<32x128xf32, #tpu.memory_space<vmem>>, %arg3: memref<32x128xi8, #tpu.memory_space<vmem>>, %arg4: memref<1x4x128xf32, #tpu.memory_space<vmem>>) attributes {dimension_semantics = [#tpu.dimension_semantics<parallel>, #tpu.dimension_semantics<arbitrary>], iteration_bounds = array<i64: 1, 1>, scalar_prefetch = 0 : i64, scratch_operands = 0 : i64, tpu.core_type = #tpu.core_type<tc>, window_params = [{transform_indices = @transform_0, window_bounds = array<i64: 32, 128>}, {transform_indices = @transform_1, window_bounds = array<i64: 32, 128>}, {transform_indices = @transform_2, window_bounds = array<i64: 1, 4, 128>}]} {
    %c0_i32 = arith.constant 0 : i32
    %0 = arith.cmpi eq, %arg1, %c0_i32 : i32
    %1 = arith.extui %0 : i1 to i32
    %c0_i32_0 = arith.constant 0 : i32
    %2 = arith.cmpi ne, %1, %c0_i32_0 : i32
    scf.if %2 {
      %cst_12 = arith.constant 0.000000e+00 : f32
      %29 = vector.broadcast %cst_12 : f32 to vector<4x128xf32>
      %c0_13 = arith.constant 0 : index
      %c0_14 = arith.constant 0 : index
      %c0_15 = arith.constant 0 : index
      %30 = vector.load %arg4[%c0_13, %c0_14, %c0_15] : memref<1x4x128xf32, #tpu.memory_space<vmem>>, vector<1x4x128xf32>
      %31 = vector.shape_cast %30 : vector<1x4x128xf32> to vector<4x128xf32>
      %32 = vector.shape_cast %29 : vector<4x128xf32> to vector<1x4x128xf32>
      tpu.vector_store %arg4[%c0_13, %c0_14, %c0_15], %32 {strides = array<i32>} : memref<1x4x128xf32, #tpu.memory_space<vmem>>, vector<1x4x128xf32>,
    } else {
    }
    %c0 = arith.constant 0 : index
    %c0_1 = arith.constant 0 : index
    %3 = vector.load %arg2[%c0, %c0_1] : memref<32x128xf32, #tpu.memory_space<vmem>>, vector<32x128xf32>
    %c0_2 = arith.constant 0 : index
    %c0_3 = arith.constant 0 : index
    %4 = vector.load %arg3[%c0_2, %c0_3] : memref<32x128xi8, #tpu.memory_space<vmem>>, vector<32x128xi8>
    %5 = arith.extsi %4 : vector<32x128xi8> to vector<32x128xi32>
    %c1_i32 = arith.constant 1 : i32
    %6 = vector.broadcast %c1_i32 : i32 to vector<32x128xi32>
    %7 = arith.cmpi eq, %5, %6 : vector<32x128xi32>
    %c0_i32_4 = arith.constant 0 : i32
    %8 = vector.broadcast %c0_i32_4 : i32 to vector<32x128xi32>
    %9 = arith.cmpi eq, %5, %8 : vector<32x128xi32>
    %cst = arith.constant 9.99999997E-7 : f32
    %cst_5 = arith.constant 0.999998986 : f32
    %10 = vector.broadcast %cst : f32 to vector<32x128xf32>
    %11 = arith.maximumf %10, %3 : vector<32x128xf32>
    %12 = vector.broadcast %cst_5 : f32 to vector<32x128xf32>
    %13 = arith.minimumf %12, %11 : vector<32x128xf32>
    %cst_6 = arith.constant 1.000000e+00 : f32
    %14 = vector.broadcast %cst_6 : f32 to vector<32x128xf32>
    %15 = arith.subf %14, %13 : vector<32x128xf32>
    %16 = arith.select %7, %15, %13 : vector<32x128xi1>, vector<32x128xf32>
    %17 = arith.select %7, %13, %15 : vector<32x128xi1>, vector<32x128xf32>
    %18 = arith.mulf %16, %16 : vector<32x128xf32>
    %19 = math.log %17 : vector<32x128xf32>
    %20 = arith.mulf %18, %19 : vector<32x128xf32>
    %c1_i32_7 = arith.constant 1 : i32
    %21 = arith.muli %arg0, %c1_i32_7 : i32
    %22 = arith.addi %21, %arg1 : i32
    %c0_i32_8 = arith.constant 0 : i32
    %23 = arith.cmpi slt, %22, %c0_i32_8 : i32
    %24 = arith.extui %23 : i1 to i32
    %c0_i32_9 = arith.constant 0 : i32
    %25 = arith.cmpi ne, %24, %c0_i32_9 : i32
    scf.if %25 {
      %cst_12 = arith.constant 0.000000e+00 : f32
      %29 = vector.broadcast %cst_12 : f32 to vector<32x128xf32>
      %30 = arith.select %7, %20, %29 : vector<32x128xi1>, vector<32x128xf32>
      %cst_13 = arith.constant 0.000000e+00 : f32
      %31 = vector.broadcast %cst_13 : f32 to vector<32x128xf32>
      %32 = arith.select %9, %20, %31 : vector<32x128xi1>, vector<32x128xf32>
      %cst_14 = arith.constant dense<0.000000e+00> : vector<128xf32>
      %33 = vector.multi_reduction <add>, %30, %cst_14 [0] : vector<32x128xf32> to vector<128xf32>
      %34 = vector.shape_cast %33 : vector<128xf32> to vector<1x128xf32>
      %cst_15 = arith.constant dense<0.000000e+00> : vector<128xf32>
      %35 = vector.multi_reduction <add>, %32, %cst_15 [0] : vector<32x128xf32> to vector<128xf32>
      %36 = vector.shape_cast %35 : vector<128xf32> to vector<1x128xf32>
      %37 = arith.extui %7 : vector<32x128xi1> to vector<32x128xi32>
      %38 = arith.sitofp %37 : vector<32x128xi32> to vector<32x128xf32>
      %cst_16 = arith.constant dense<0.000000e+00> : vector<128xf32>
      %39 = vector.multi_reduction <add>, %38, %cst_16 [0] : vector<32x128xf32> to vector<128xf32>
      %40 = vector.shape_cast %39 : vector<128xf32> to vector<1x128xf32>
      %41 = arith.extui %9 : vector<32x128xi1> to vector<32x128xi32>
      %42 = arith.sitofp %41 : vector<32x128xi32> to vector<32x128xf32>
      %cst_17 = arith.constant dense<0.000000e+00> : vector<128xf32>
      %43 = vector.multi_reduction <add>, %42, %cst_17 [0] : vector<32x128xf32> to vector<128xf32>
      %44 = vector.shape_cast %43 : vector<128xf32> to vector<1x128xf32>
      %45 = tpu.concatenate %34, %36, %40, %44 in 0 : vector<1x128xf32>, vector<1x128xf32>, vector<1x128xf32>, vector<1x128xf32> -> vector<4x128xf32>
      %c0_18 = arith.constant 0 : index
      %c0_19 = arith.constant 0 : index
      %c0_20 = arith.constant 0 : index
      %46 = vector.load %arg4[%c0_18, %c0_19, %c0_20] : memref<1x4x128xf32, #tpu.memory_space<vmem>>, vector<1x4x128xf32>
      %47 = vector.shape_cast %46 : vector<1x4x128xf32> to vector<4x128xf32>
      %48 = arith.addf %47, %45 : vector<4x128xf32>
      %c0_21 = arith.constant 0 : index
      %c0_22 = arith.constant 0 : index
      %c0_23 = arith.constant 0 : index
      %49 = vector.load %arg4[%c0_21, %c0_22, %c0_23] : memref<1x4x128xf32, #tpu.memory_space<vmem>>, vector<1x4x128xf32>
      %50 = vector.shape_cast %49 : vector<1x4x128xf32> to vector<4x128xf32>
      %51 = vector.shape_cast %48 : vector<4x128xf32> to vector<1x4x128xf32>
      tpu.vector_store %arg4[%c0_21, %c0_22, %c0_23], %51 {strides = array<i32>} : memref<1x4x128xf32, #tpu.memory_space<vmem>>, vector<1x4x128xf32>,
    } else {
    }
    %c0_i32_10 = arith.constant 0 : i32
    %26 = arith.cmpi sge, %22, %c0_i32_10 : i32
    %27 = arith.extui %26 : i1 to i32
    %c0_i32_11 = arith.constant 0 : i32
    %28 = arith.cmpi ne, %27, %c0_i32_11 : i32
    scf.if %28 {
      %29 = tpu.iota {dimensions = array<i32: 0>} : vector<32x128xi32>
      %30 = tpu.iota {dimensions = array<i32: 1>} : vector<32x128xi32>
      %c4096_i32 = arith.constant 4096 : i32
      %31 = arith.muli %22, %c4096_i32 : i32
      %c128_i32 = arith.constant 128 : i32
      %32 = vector.broadcast %c128_i32 : i32 to vector<32x128xi32>
      %33 = arith.muli %29, %32 : vector<32x128xi32>
      %34 = vector.broadcast %31 : i32 to vector<32x128xi32>
      %35 = arith.addi %34, %33 : vector<32x128xi32>
      %36 = arith.addi %35, %30 : vector<32x128xi32>
      %c2048_i32 = arith.constant 2048 : i32
      %37 = vector.broadcast %c2048_i32 : i32 to vector<32x128xi32>
      %38 = arith.cmpi slt, %36, %37 : vector<32x128xi32>
      %39 = arith.andi %7, %38 : vector<32x128xi1>
      %40 = arith.andi %9, %38 : vector<32x128xi1>
      %cst_12 = arith.constant 0.000000e+00 : f32
      %41 = vector.broadcast %cst_12 : f32 to vector<32x128xf32>
      %42 = arith.select %39, %20, %41 : vector<32x128xi1>, vector<32x128xf32>
      %cst_13 = arith.constant 0.000000e+00 : f32
      %43 = vector.broadcast %cst_13 : f32 to vector<32x128xf32>
      %44 = arith.select %40, %20, %43 : vector<32x128xi1>, vector<32x128xf32>
      %cst_14 = arith.constant dense<0.000000e+00> : vector<128xf32>
      %45 = vector.multi_reduction <add>, %42, %cst_14 [0] : vector<32x128xf32> to vector<128xf32>
      %46 = vector.shape_cast %45 : vector<128xf32> to vector<1x128xf32>
      %cst_15 = arith.constant dense<0.000000e+00> : vector<128xf32>
      %47 = vector.multi_reduction <add>, %44, %cst_15 [0] : vector<32x128xf32> to vector<128xf32>
      %48 = vector.shape_cast %47 : vector<128xf32> to vector<1x128xf32>
      %49 = arith.extui %39 : vector<32x128xi1> to vector<32x128xi32>
      %50 = arith.sitofp %49 : vector<32x128xi32> to vector<32x128xf32>
      %cst_16 = arith.constant dense<0.000000e+00> : vector<128xf32>
      %51 = vector.multi_reduction <add>, %50, %cst_16 [0] : vector<32x128xf32> to vector<128xf32>
      %52 = vector.shape_cast %51 : vector<128xf32> to vector<1x128xf32>
      %53 = arith.extui %40 : vector<32x128xi1> to vector<32x128xi32>
      %54 = arith.sitofp %53 : vector<32x128xi32> to vector<32x128xf32>
      %cst_17 = arith.constant dense<0.000000e+00> : vector<128xf32>
      %55 = vector.multi_reduction <add>, %54, %cst_17 [0] : vector<32x128xf32> to vector<128xf32>
      %56 = vector.shape_cast %55 : vector<128xf32> to vector<1x128xf32>
      %57 = tpu.concatenate %46, %48, %52, %56 in 0 : vector<1x128xf32>, vector<1x128xf32>, vector<1x128xf32>, vector<1x128xf32> -> vector<4x128xf32>
      %c0_18 = arith.constant 0 : index
      %c0_19 = arith.constant 0 : index
      %c0_20 = arith.constant 0 : index
      %58 = vector.load %arg4[%c0_18, %c0_19, %c0_20] : memref<1x4x128xf32, #tpu.memory_space<vmem>>, vector<1x4x128xf32>
      %59 = vector.shape_cast %58 : vector<1x4x128xf32> to vector<4x128xf32>
      %60 = arith.addf %59, %57 : vector<4x128xf32>
      %c0_21 = arith.constant 0 : index
      %c0_22 = arith.constant 0 : index
      %c0_23 = arith.constant 0 : index
      %61 = vector.load %arg4[%c0_21, %c0_22, %c0_23] : memref<1x4x128xf32, #tpu.memory_space<vmem>>, vector<1x4x128xf32>
      %62 = vector.shape_cast %61 : vector<1x4x128xf32> to vector<4x128xf32>
      %63 = vector.shape_cast %60 : vector<4x128xf32> to vector<1x4x128xf32>
      tpu.vector_store %arg4[%c0_21, %c0_22, %c0_23], %63 {strides = array<i32>} : memref<1x4x128xf32, #tpu.memory_space<vmem>>, vector<1x4x128xf32>,
    } else {
    }
    return
  }
  func.func @transform_0(%arg0: i32, %arg1: i32) -> (i32, i32) {
    %c1_i32 = arith.constant 1 : i32
    %0 = arith.muli %arg0, %c1_i32 : i32
    %1 = arith.addi %0, %arg1 : i32
    %c0_i32 = arith.constant 0 : i32
    %2 = arith.minsi %1, %c0_i32 : i32
    %c0_i32_0 = arith.constant 0 : i32
    %c0_i32_1 = arith.constant 0 : i32
    return %2, %c0_i32_0 : i32, i32
  }
  func.func @transform_1(%arg0: i32, %arg1: i32) -> (i32, i32) {
    %c1_i32 = arith.constant 1 : i32
    %0 = arith.muli %arg0, %c1_i32 : i32
    %1 = arith.addi %0, %arg1 : i32
    %c0_i32 = arith.constant 0 : i32
    %2 = arith.minsi %1, %c0_i32 : i32
    %c0_i32_0 = arith.constant 0 : i32
    %c0_i32_1 = arith.constant 0 : i32
    return %2, %c0_i32_0 : i32, i32
  }
  func.func @transform_2(%arg0: i32, %arg1: i32) -> (i32, i32, i32) {
    %c0_i32 = arith.constant 0 : i32
    %c0_i32_0 = arith.constant 0 : i32
    %c0_i32_1 = arith.constant 0 : i32
    return %arg0, %c0_i32, %c0_i32_0 : i32, i32, i32
  }
}

</mosaic_0001>

<llo_original>
// kernel: binary_focal_loss.1
$region0: #{binary_focal_loss.1}
  #allocation0 [shape = 'u32[]', space=smem, size = 0x4, offset = 0x4, fixed_abs, tag = 'smem constant byte address 0x4 - core index']
  #allocation1 [shape = 'u32[144,128]{1,0:T(1,128)}', space=vmem, size = 0x12000, scoped, tag = 'internal scratch']
  %s0 = inlined_call_operand.vmem [shape: f32[16,128], index: 0, kind: input, shape index: {}]
  %s1 = inlined_call_operand.vmem [shape: s8[16,128], index: 1, kind: input, shape index: {}]
  %s2 = inlined_call_operand.vmem [shape: f32[1,4,128], index: 2, kind: output, shape index: {}]
  %s3 = sld [smem:[#allocation0]]
  $region30: #{binary_focal_loss.1} parent=0
    _
  %s5 = ssub.s32 1, %s3
  %s6 = scalar_select 0, %s5, %s3
  // Predicated region
  $region2: #{binary_focal_loss.1} parent=0 // pred_check
    _
  $region3: #{binary_focal_loss.1} parent=0 // pred_check_branch
    %8 = sbr.rel (0) target = $region5
  $region4: #{binary_focal_loss.1} parent=0 // pred_region
    %s9 = sadd.s32 0, 0
    %p10 = scmp.lt.s32.totalorder %s9, 0
    %s11 = scalar_select %p10, %s9, 0
    %s12 = smul.u32 4, %s11
    %s13 = ssub.s32 2, %s12
    %s14 = smul.u32 128, %s13
    %p15 = scmp.lt.s32.totalorder %s12, 1
    %s16 = scalar_select %p15, %s12, 1
    %s17 = smul.addr %s16, 8
    %s18 = scalar_lea.vmem %s0, %s17
    %s19 = sadd.s32 0, 0
    %p20 = scmp.lt.s32.totalorder %s19, 0
    %s21 = scalar_select %p20, %s19, 0
    %s22 = smul.u32 4, %s21
    %s23 = ssub.s32 2, %s22
    %s24 = smul.u32 128, %s23
  $region5: #{binary_focal_loss.1} parent=0 // pred_fallthru
    _
  // Predicated region
  $region6: #{binary_focal_loss.1} parent=0 // pred_check
    _
  $region7: #{binary_focal_loss.1} parent=0 // pred_check_branch
    %26 = sbr.rel (0) target = $region9
  $region8: #{binary_focal_loss.1} parent=0 // pred_region
    %s27 = sadd.s32 0, 0
    %p28 = scmp.lt.s32.totalorder %s27, 0
    %s29 = scalar_select %p28, %s27, 0
    %s30 = smul.u32 4, %s29
    %s31 = ssub.s32 2, %s30
    %s32 = smul.u32 32, %s31
    %p33 = scmp.lt.s32.totalorder %s30, 1
    %s34 = scalar_select %p33, %s30, 1
    %s35 = smul.addr %s34, 2
    %s36 = scalar_lea.vmem %s1, %s35
    %s37 = sadd.s32 0, 0
    %p38 = scmp.lt.s32.totalorder %s37, 0
    %s39 = scalar_select %p38, %s37, 0
    %s40 = smul.u32 4, %s39
    %s41 = ssub.s32 2, %s40
    %s42 = smul.u32 32, %s41
  $region9: #{binary_focal_loss.1} parent=0 // pred_fallthru
    _
  %s43 = sadd.s32 0, 0
  %p44 = scmp.lt.s32.totalorder %s43, 0
  %s45 = scalar_select %p44, %s43, 0
  %s46 = smul.u32 4, %s45
  %s47 = ssub.s32 2, %s46
  %s48 = smul.u32 128, %s47
  %p49 = scmp.lt.s32.totalorder %s46, 1
  %s50 = scalar_select %p49, %s46, 1
  %s51 = smul.addr %s50, 8
  %s52 = scalar_lea.vmem %s0, %s51
  %s53 = sadd.s32 0, 0
  %p54 = scmp.lt.s32.totalorder %s53, 0
  %s55 = scalar_select %p54, %s53, 0
  %s56 = smul.u32 4, %s55
  %s57 = ssub.s32 2, %s56
  %s58 = smul.u32 32, %s57
  %p59 = scmp.lt.s32.totalorder %s56, 1
  %s60 = scalar_select %p59, %s56, 1
  %s61 = smul.addr %s60, 2
  %s62 = scalar_lea.vmem %s1, %s61
  %s63 = sadd.s32 0, 0
  %p64 = scmp.lt.s32.totalorder %s63, 0
  %s65 = scalar_select %p64, %s63, 0
  %s66 = smul.u32 4, %s65
  %s67 = ssub.s32 2, %s66
  %s68 = smul.u32 128, %s67
  %p69 = scmp.lt.s32.totalorder %s66, 1
  %s70 = scalar_select %p69, %s66, 1
  %s71 = smul.addr %s70, 8
  %s72 = scalar_lea.vmem %s0, %s71
  %s73 = sadd.s32 0, 0
  %p74 = scmp.lt.s32.totalorder %s73, 0
  %s75 = scalar_select %p74, %s73, 0
  %s76 = smul.u32 4, %s75
  %s77 = ssub.s32 2, %s76
  %s78 = smul.u32 128, %s77
  %s79 = sadd.s32 0, 0
  %p80 = scmp.lt.s32.totalorder %s79, 0
  %s81 = scalar_select %p80, %s79, 0
  %s82 = smul.u32 4, %s81
  %s83 = ssub.s32 2, %s82
  %s84 = smul.u32 32, %s83
  %p85 = scmp.lt.s32.totalorder %s82, 1
  %s86 = scalar_select %p85, %s82, 1
  %s87 = smul.addr %s86, 2
  %s88 = scalar_lea.vmem %s1, %s87
  %s89 = sadd.s32 0, 0
  %p90 = scmp.lt.s32.totalorder %s89, 0
  %s91 = scalar_select %p90, %s89, 0
  %s92 = smul.u32 4, %s91
  %s93 = ssub.s32 2, %s92
  %s94 = smul.u32 32, %s93
  %p95 = scmp.eq.s32.totalorder 0, 0
  // Predicated region
  $region10: #{binary_focal_loss.1} parent=0 // pred_check
    %p96 = pneg %p95
  $region11: #{binary_focal_loss.1} parent=0 // pred_check_branch
    %98 = sbr.rel (%p96) target = $region13
  $region12: #{binary_focal_loss.1} parent=0 // pred_region
    %99 = vst [vmem:[%s2] sm:$0xf] 0.0
  $region13: #{binary_focal_loss.1} parent=0 // pred_fallthru
    _
  %v100 = vld [vmem:[%s72] sm:$0xff]
  %v101 = vld [vmem:[%s72 + $0x8] sm:$0xff]
  %v102 = vld [vmem:[%s72 + $0x10] sm:$0xff]
  %v103 = vld [vmem:[%s72 + $0x18] sm:$0xff]
  %v104 = vld [vmem:[%s88] sm:$0x3]
  %v105 = vld [vmem:[%s88 + $0x2] sm:$0x3]
  %v106 = vld [vmem:[%s88 + $0x4] sm:$0x3]
  %v107 = vld [vmem:[%s88 + $0x6] sm:$0x3]
  %v108 = vunpack.c.0.s8 %v104
  %v109 = vunpack.c.0.s8 %v105
  %v110 = vunpack.c.0.s8 %v106
  %v111 = vunpack.c.0.s8 %v107
  %vm112 = vcmp.eq.s32.totalorder %v108, 1
  %vm113 = vcmp.eq.s32.totalorder %v109, 1
  %vm114 = vcmp.eq.s32.totalorder %v110, 1
  %vm115 = vcmp.eq.s32.totalorder %v111, 1
  %vm116 = vcmp.eq.s32.totalorder %v108, 0
  %vm117 = vcmp.eq.s32.totalorder %v109, 0
  %vm118 = vcmp.eq.s32.totalorder %v110, 0
  %vm119 = vcmp.eq.s32.totalorder %v111, 0
  %v120 = vmax.f32 %v100, 1e-06
  %v121 = vmax.f32 %v101, 1e-06
  %v122 = vmax.f32 %v102, 1e-06
  %v123 = vmax.f32 %v103, 1e-06
  %v124 = vmin.f32 %v120, 0.999999
  %v125 = vmin.f32 %v121, 0.999999
  %v126 = vmin.f32 %v122, 0.999999
  %v127 = vmin.f32 %v123, 0.999999
  %v128 = vsub.f32 1.0, %v124
  %v129 = vsub.f32 1.0, %v125
  %v130 = vsub.f32 1.0, %v126
  %v131 = vsub.f32 1.0, %v127
  %v132 = vsel %vm112, %v128, %v124
  %v133 = vsel %vm113, %v129, %v125
  %v134 = vsel %vm114, %v130, %v126
  %v135 = vsel %vm115, %v131, %v127
  %v136 = vsel %vm112, %v124, %v128
  %v137 = vsel %vm113, %v125, %v129
  %v138 = vsel %vm114, %v126, %v130
  %v139 = vsel %vm115, %v127, %v131
  %v140 = vmul.f32 %v132, %v132
  %v141 = vmul.f32 %v133, %v133
  %v142 = vmul.f32 %v134, %v134
  %v143 = vmul.f32 %v135, %v135
  %v144 = vlog2.pop %v136
  %v145 = vmul.f32 %v144, 0.6931472
  %v146 = vlog2.pop %v137
  %v147 = vmul.f32 %v146, 0.6931472
  %v148 = vlog2.pop %v138
  %v149 = vmul.f32 %v148, 0.6931472
  %v150 = vlog2.pop %v139
  %v151 = vmul.f32 %v150, 0.6931472
  %v152 = vmul.f32 %v140, %v145
  %v153 = vmul.f32 %v141, %v147
  %v154 = vmul.f32 %v142, %v149
  %v155 = vmul.f32 %v143, %v151
  %s156 = sadd.s32 0, 0
  %p157 = scmp.lt.s32.totalorder %s156, 0
  // Predicated region
  $region14: #{binary_focal_loss.1} parent=0 // pred_check
    %p158 = pneg %p157
  $region15: #{binary_focal_loss.1} parent=0 // pred_check_branch
    %160 = sbr.rel (%p158) target = $region17
  $region16: #{binary_focal_loss.1} parent=0 // pred_region
    %v161 = vsel %vm112, %v152, 0.0
    %v162 = vsel %vm113, %v153, 0.0
    %v163 = vsel %vm114, %v154, 0.0
    %v164 = vsel %vm115, %v155, 0.0
    %v165 = vsel %vm116, %v152, 0.0
    %v166 = vsel %vm117, %v153, 0.0
    %v167 = vsel %vm118, %v154, 0.0
    %v168 = vsel %vm119, %v155, 0.0
    %v169 = vadd.f32 %v161, %v162
    %v170 = vadd.f32 %v169, %v163
    %v171 = vadd.f32 %v170, %v164
    %v172 = vrot.slane %v171, 4
    %v173 = vadd.f32 %v171, %v172
    %v174 = vrot.slane %v173, 2
    %v175 = vadd.f32 %v173, %v174
    %v176 = vrot.slane %v175, 1
    %v177 = vadd.f32 %v175, %v176
    %v178 = vadd.f32 %v165, %v166
    %v179 = vadd.f32 %v178, %v167
    %v180 = vadd.f32 %v179, %v168
    %v181 = vrot.slane %v180, 4
    %v182 = vadd.f32 %v180, %v181
    %v183 = vrot.slane %v182, 2
    %v184 = vadd.f32 %v182, %v183
    %v185 = vrot.slane %v184, 1
    %v186 = vadd.f32 %v184, %v185
    %v187 = vsel %vm112, 1, 0
    %v188 = vsel %vm113, 1, 0
    %v189 = vsel %vm114, 1, 0
    %v190 = vsel %vm115, 1, 0
    %v191 = vcvt.s32.f32 %v187
    %v192 = vcvt.s32.f32 %v188
    %v193 = vcvt.s32.f32 %v189
    %v194 = vcvt.s32.f32 %v190
    %v195 = vadd.f32 %v191, %v192
    %v196 = vadd.f32 %v195, %v193
    %v197 = vadd.f32 %v196, %v194
    %v198 = vrot.slane %v197, 4
    %v199 = vadd.f32 %v197, %v198
    %v200 = vrot.slane %v199, 2
    %v201 = vadd.f32 %v199, %v200
    %v202 = vrot.slane %v201, 1
    %v203 = vadd.f32 %v201, %v202
    %v204 = vsel %vm116, 1, 0
    %v205 = vsel %vm117, 1, 0
    %v206 = vsel %vm118, 1, 0
    %v207 = vsel %vm119, 1, 0
    %v208 = vcvt.s32.f32 %v204
    %v209 = vcvt.s32.f32 %v205
    %v210 = vcvt.s32.f32 %v206
    %v211 = vcvt.s32.f32 %v207
    %v212 = vadd.f32 %v208, %v209
    %v213 = vadd.f32 %v212, %v210
    %v214 = vadd.f32 %v213, %v211
    %v215 = vrot.slane %v214, 4
    %v216 = vadd.f32 %v214, %v215
    %v217 = vrot.slane %v216, 2
    %v218 = vadd.f32 %v216, %v217
    %v219 = vrot.slane %v218, 1
    %v220 = vadd.f32 %v218, %v219
    %vm221 = vcmask 1040384
    %v222 = vsel %vm221, %v177, %v186
    %vm223 = vcmask 1041408
    %v224 = vsel %vm223, %v222, %v203
    %vm225 = vcmask 1042432
    %v226 = vsel %vm225, %v224, %v220
    %v227 = vld [vmem:[%s2] sm:$0xf]
    %v228 = vadd.f32 %v227, %v226
    %229 = vst [vmem:[%s2] sm:$0xf] %v228
  $region17: #{binary_focal_loss.1} parent=0 // pred_fallthru
    _
  %p230 = scmp.ge.s32.totalorder %s156, 0
  // Predicated region
  $region18: #{binary_focal_loss.1} parent=0 // pred_check
    %p231 = pneg %p230
  $region19: #{binary_focal_loss.1} parent=0 // pred_check_branch
    %233 = sbr.rel (%p231) target = $region21
  $region20: #{binary_focal_loss.1} parent=0 // pred_region
    %v234 = vlaneseq
    %v235 = vshrl.u32 %v234, 7
    %v236 = vadd.s32 %v235, 8
    %v237 = vadd.s32 %v235, 16
    %v238 = vadd.s32 %v235, 24
    %v239 = vlaneseq
    %v240 = vand.u32 %v239, 127
    %s241 = smul.u32 %s156, 4096
    %v242 = vmul.u32 %v235, 128
    %v243 = vmul.u32 %v236, 128
    %v244 = vmul.u32 %v237, 128
    %v245 = vmul.u32 %v238, 128
    %v246 = vstv %s241
    %v247 = vadd.s32 %v246, %v242
    %v248 = vadd.s32 %v246, %v243
    %v249 = vadd.s32 %v246, %v244
    %v250 = vadd.s32 %v246, %v245
    %v251 = vadd.s32 %v247, %v240
    %v252 = vadd.s32 %v248, %v240
    %v253 = vadd.s32 %v249, %v240
    %v254 = vadd.s32 %v250, %v240
    %vm255 = vcmp.lt.s32.totalorder %v251, 2048
    %vm256 = vcmp.lt.s32.totalorder %v252, 2048
    %vm257 = vcmp.lt.s32.totalorder %v253, 2048
    %vm258 = vcmp.lt.s32.totalorder %v254, 2048
    %vm259 = vmand %vm112, %vm255
    %vm260 = vmand %vm113, %vm256
    %vm261 = vmand %vm114, %vm257
    %vm262 = vmand %vm115, %vm258
    %vm263 = vmand %vm116, %vm255
    %vm264 = vmand %vm117, %vm256
    %vm265 = vmand %vm118, %vm257
    %vm266 = vmand %vm119, %vm258
    %v267 = vsel %vm259, %v152, 0.0
    %v268 = vsel %vm260, %v153, 0.0
    %v269 = vsel %vm261, %v154, 0.0
    %v270 = vsel %vm262, %v155, 0.0
    %v271 = vsel %vm263, %v152, 0.0
    %v272 = vsel %vm264, %v153, 0.0
    %v273 = vsel %vm265, %v154, 0.0
    %v274 = vsel %vm266, %v155, 0.0
    %v275 = vadd.f32 %v267, %v268
    %v276 = vadd.f32 %v275, %v269
    %v277 = vadd.f32 %v276, %v270
    %v278 = vrot.slane %v277, 4
    %v279 = vadd.f32 %v277, %v278
    %v280 = vrot.slane %v279, 2
    %v281 = vadd.f32 %v279, %v280
    %v282 = vrot.slane %v281, 1
    %v283 = vadd.f32 %v281, %v282
    %v284 = vadd.f32 %v271, %v272
    %v285 = vadd.f32 %v284, %v273
    %v286 = vadd.f32 %v285, %v274
    %v287 = vrot.slane %v286, 4
    %v288 = vadd.f32 %v286, %v287
    %v289 = vrot.slane %v288, 2
    %v290 = vadd.f32 %v288, %v289
    %v291 = vrot.slane %v290, 1
    %v292 = vadd.f32 %v290, %v291
    %v293 = vsel %vm259, 1, 0
    %v294 = vsel %vm260, 1, 0
    %v295 = vsel %vm261, 1, 0
    %v296 = vsel %vm262, 1, 0
    %v297 = vcvt.s32.f32 %v293
    %v298 = vcvt.s32.f32 %v294
    %v299 = vcvt.s32.f32 %v295
    %v300 = vcvt.s32.f32 %v296
    %v301 = vadd.f32 %v297, %v298
    %v302 = vadd.f32 %v301, %v299
    %v303 = vadd.f32 %v302, %v300
    %v304 = vrot.slane %v303, 4
    %v305 = vadd.f32 %v303, %v304
    %v306 = vrot.slane %v305, 2
    %v307 = vadd.f32 %v305, %v306
    %v308 = vrot.slane %v307, 1
    %v309 = vadd.f32 %v307, %v308
    %v310 = vsel %vm263, 1, 0
    %v311 = vsel %vm264, 1, 0
    %v312 = vsel %vm265, 1, 0
    %v313 = vsel %vm266, 1, 0
    %v314 = vcvt.s32.f32 %v310
    %v315 = vcvt.s32.f32 %v311
    %v316 = vcvt.s32.f32 %v312
    %v317 = vcvt.s32.f32 %v313
    %v318 = vadd.f32 %v314, %v315
    %v319 = vadd.f32 %v318, %v316
    %v320 = vadd.f32 %v319, %v317
    %v321 = vrot.slane %v320, 4
    %v322 = vadd.f32 %v320, %v321
    %v323 = vrot.slane %v322, 2
    %v324 = vadd.f32 %v322, %v323
    %v325 = vrot.slane %v324, 1
    %v326 = vadd.f32 %v324, %v325
    %vm327 = vcmask 1040384
    %v328 = vsel %vm327, %v283, %v292
    %vm329 = vcmask 1041408
    %v330 = vsel %vm329, %v328, %v309
    %vm331 = vcmask 1042432
    %v332 = vsel %vm331, %v330, %v326
    %v333 = vld [vmem:[%s2] sm:$0xf]
    %v334 = vadd.f32 %v333, %v332
    %335 = vst [vmem:[%s2] sm:$0xf] %v334
  $region21: #{binary_focal_loss.1} parent=0 // pred_fallthru
    _
  // Predicated region
  $region22: #{binary_focal_loss.1} parent=0 // pred_check
    _
  $region23: #{binary_focal_loss.1} parent=0 // pred_check_branch
    %337 = sbr.rel (0) target = $region25
  $region24: #{binary_focal_loss.1} parent=0 // pred_region
    _
  $region25: #{binary_focal_loss.1} parent=0 // pred_fallthru
    _
  // Predicated region
  $region26: #{binary_focal_loss.1} parent=0 // pred_check
    _
  $region27: #{binary_focal_loss.1} parent=0 // pred_check_branch
    %339 = sbr.rel (0) target = $region29
  $region28: #{binary_focal_loss.1} parent=0 // pred_region
    _
  $region29: #{binary_focal_loss.1} parent=0 // pred_fallthru
    _

</llo_original>
